<compile_context>
chip_gen: v6e
topology: v6e:2x2x1
jax: 0.10.0
libtpu: 0.0.40
codegen_flags: <defaults>
</compile_context>

<pallas_src>
import functools

import jax
import jax.numpy as jnp
import numpy as np
from jax.experimental import pallas as pl
from jax.experimental.pallas import tpu as pltpu

# ----- MTSQ quantization constants (MTSQConfig defaults: 8-bit, asymmetric) -----
QMIN, QMAX = 0.0, 255.0
EPS = 1e-8
SCALE_MIN = 1e-6


def mtsq_fake_quantize_weight(w):
    """Per-output-channel asymmetric fake quantization with power-of-two scales.

    w: (Cout, Cin, KH, KW)  ->  dequantized weight of same shape.

    Mirrors the PyTorch sequence applied by MTSQLayer.apply_quantization
    (minus the Adam updates, see TODO above), in the same order:
      1. _initialize_parameters: scale from min/max, zero_point from the
         PRE-clip scale, then power-of-two clip of scale.
      2. optimize_parameters epilogue: clamp(scale, SCALE_MIN) then power-of-two
         clip again (the second rounding may legitimately land below SCALE_MIN --
         this matches the reference clamp->round order).
      3. zero_point is kept as a float and is NOT recomputed after clipping,
         exactly as in the reference implementation.
    """
    t_min = jnp.min(w, axis=(1, 2, 3), keepdims=True)
    t_max = jnp.max(w, axis=(1, 2, 3), keepdims=True)
    mask = (t_max - t_min) > EPS
    scale = jnp.where(mask, (t_max - t_min) / (QMAX - QMIN), 1.0)
    zero_point = jnp.where(mask, QMIN - t_min / scale, 0.0)       # pre-clip scale
    # _initialize_parameters: power-of-two clip
    scale = jnp.power(2.0, jnp.round(jnp.log2(jnp.clip(scale, 1e-8, None))))
    # epilogue: clamp to SCALE_MIN, then power-of-two clip again
    scale = jnp.maximum(scale, SCALE_MIN)
    scale = jnp.power(2.0, jnp.round(jnp.log2(jnp.clip(scale, 1e-8, None))))
    q = jnp.clip(jnp.round(w / scale + zero_point), QMIN, QMAX)
    return scale * (q - zero_point)


# ----- Pallas kernel: stride-1 "same"-padded KHxKW conv, whole batch at once -----
def conv2d_kernel(x_ref, w_ref, mask_ref, o_ref, cols_ref, *, taps, Cin, HW):
    # x_ref:    (B, Cin, HW)     NCHW activations with flattened spatial dims
    # w_ref:    (Cout, KPAD)     columns ordered (kh, kw, ci); column K = bias
    # mask_ref: (KPAD, B*HW)     0/1 tap-validity rows; row K = ones (bias row)
    # o_ref:    (B, Cout, HW)    lane-dense output (HW multiple of 128)
    # cols_ref: (KPAD, B*HW)     VMEM scratch holding the masked im2col slab
    B = x_ref.shape[0]
    BHW = B * HW
    ntaps = len(taps)

    # Merge the batch into the lane axis (lane-aligned: HW is a multiple of 128).
    xm = jnp.concatenate([x_ref[b] for b in range(B)], axis=1)      # (Cin, B*HW)

    # im2col: one XLU roll per tap on the merged slab; image-boundary and
    # cross-batch wraparound elements are zeroed by the precomputed mask.
    for t, (s, full_valid) in enumerate(taps):
        r0 = t * Cin
        val = xm if s == 0 else pltpu.roll(xm, (-s) % BHW, 1)
        if not full_valid:
            val = val * mask_ref[r0:r0 + Cin, :]
        cols_ref[r0:r0 + Cin, :] = val

    # Bias ones-row + zero K-padding rows copied straight from the mask constant.
    cols_ref[ntaps * Cin:, :] = mask_ref[ntaps * Cin:, :]

    # Single MXU pass: (Cout, KPAD) x (KPAD, B*HW); bias folded in as a K-row.
    acc = jnp.dot(w_ref[...], cols_ref[...], preferred_element_type=jnp.float32)

    for b in range(B):               # aligned 256-lane slices -> unmasked stores
        o_ref[b] = acc[:, b * HW:(b + 1) * HW].astype(o_ref.dtype)


def _build_im2col_mask(B, Cin, H, W, KH, KW, kpad):
    """Static 0/1 validity mask for every (tap, ci) row of the im2col slab, plus
    a ones row for the bias and zero padding rows.  Built in numpy (trace time)."""
    HW = H * W
    p = np.arange(B * HW)
    yy = (p // W) % H                 # row within each image
    xx = p % W                        # column within each image
    mask = np.zeros((kpad, B * HW), dtype=np.float32)
    t = 0
    for kh in range(KH):
        for kw in range(KW):
            dy, dx = kh - KH // 2, kw - KW // 2
            valid = ((yy + dy >= 0) & (yy + dy < H) &
                     (xx + dx >= 0) & (xx + dx < W))
            mask[t * Cin:(t + 1) * Cin, :] = valid.astype(np.float32)[None, :]
            t += 1
    mask[KH * KW * Cin, :] = 1.0      # bias row
    return mask


def mtsq_conv2d_forward(x_nchw, w_oihw, bias):
    """Conv2d(stride=1, padding=K//2 'same') forward via the Pallas kernel.

    x_nchw: (B, Cin, H, W), w_oihw: (Cout, Cin, KH, KW), bias: (Cout,)
    Returns NCHW output (B, Cout, H, W).  Activation tensor sees only free
    reshapes on the wrapper side; weight/mask prep is tiny and done once.
    """
    B, Cin, H, W = x_nchw.shape
    Cout, _, KH, KW = w_oihw.shape
    HW = H * W
    K = KH * KW * Cin
    KPAD = ((K + 1 + 7) // 8) * 8     # taps + bias row, rounded to 8 sublanes

    x3 = x_nchw.reshape(B, Cin, HW)                               # free reshape

    # Weight as (Cout, KPAD): columns ordered (kh, kw, ci), bias column at K,
    # zero padding to an 8-aligned contraction dim.
    w_taps = jnp.transpose(w_oihw, (0, 2, 3, 1)).reshape(Cout, K)  # tiny
    w_mat = jnp.zeros((Cout, KPAD), dtype=w_oihw.dtype)
    w_mat = w_mat.at[:, :K].set(w_taps)
    w_mat = w_mat.at[:, K].set(bias)

    mask = jnp.asarray(_build_im2col_mask(B, Cin, H, W, KH, KW, KPAD))

    taps = tuple(((kh - KH // 2) * W + (kw - KW // 2),            # lane shift
                  (kh == KH // 2) and (kw == KW // 2))            # fully valid
                 for kh in range(KH) for kw in range(KW))

    kernel = functools.partial(conv2d_kernel, taps=taps, Cin=Cin, HW=HW)
    vmem = pl.BlockSpec(memory_space=pltpu.MemorySpace.VMEM)       # whole array
    out = pl.pallas_call(
        kernel,
        out_shape=jax.ShapeDtypeStruct((B, Cout, HW), x_nchw.dtype),
        in_specs=[vmem, vmem, vmem],
        out_specs=vmem,
        scratch_shapes=[pltpu.VMEM((KPAD, B * HW), jnp.float32)],
        # Grid-less: single invocation, everything VMEM-resident (KiB scale).
    )(x3, w_mat, mask)

    return out.reshape(B, Cout, H, W)                             # free reshape


if __name__ == "__main__":
    key = jax.random.PRNGKey(0)
    kx, kw, kb = jax.random.split(key, 3)

    B, Cin, H, W = 2, 4, 16, 16
    Cout, KH, KW = 8, 3, 3

    x = jax.random.normal(kx, (B, Cin, H, W), dtype=jnp.float32)
    w_fp = jax.random.normal(kw, (Cout, Cin, KH, KW), dtype=jnp.float32) * 0.1
    bias = jax.random.normal(kb, (Cout,), dtype=jnp.float32) * 0.05

    # MTSQLayer.apply_quantization leaves the dequantized weight inside the layer.
    w_dq = mtsq_fake_quantize_weight(w_fp)

    out = mtsq_conv2d_forward(x, w_dq, bias)
    out = jax.block_until_ready(out)

    # Sanity check against XLA's conv (same NCHW/OIHW semantics as PyTorch).
    ref = jax.lax.conv_general_dilated(
        x, w_dq, window_strides=(1, 1), padding=((1, 1), (1, 1)),
        dimension_numbers=("NCHW", "OIHW", "NCHW"),
    ) + bias.reshape(1, Cout, 1, 1)
    ref = jax.block_until_ready(ref)

    assert out.shape == (B, Cout, H, W)
    np.testing.assert_allclose(np.asarray(out), np.asarray(ref), rtol=1e-4, atol=1e-4)

    print("KERNEL_OK")
</pallas_src>

<mosaic_0001>
module attributes {stable_mosaic.version = 11 : i64} {
  func.func @conv2d_kernel(%arg0: memref<2x4x256xf32, #tpu.memory_space<vmem>>, %arg1: memref<8x40xf32, #tpu.memory_space<vmem>>, %arg2: memref<40x512xf32, #tpu.memory_space<vmem>>, %arg3: memref<2x8x256xf32, #tpu.memory_space<vmem>>, %arg4: memref<40x512xf32, #tpu.memory_space<vmem>>) attributes {dimension_semantics = [], scalar_prefetch = 0 : i64, scratch_operands = 1 : i64, tpu.core_type = #tpu.core_type<tc>} {
    %c0 = arith.constant 0 : index
    %c0_0 = arith.constant 0 : index
    %c0_1 = arith.constant 0 : index
    %0 = vector.load %arg0[%c0, %c0_0, %c0_1] : memref<2x4x256xf32, #tpu.memory_space<vmem>>, vector<1x4x256xf32>
    %1 = vector.shape_cast %0 : vector<1x4x256xf32> to vector<4x256xf32>
    %c1 = arith.constant 1 : index
    %c0_2 = arith.constant 0 : index
    %c0_3 = arith.constant 0 : index
    %2 = vector.load %arg0[%c1, %c0_2, %c0_3] : memref<2x4x256xf32, #tpu.memory_space<vmem>>, vector<1x4x256xf32>
    %3 = vector.shape_cast %2 : vector<1x4x256xf32> to vector<4x256xf32>
    %4 = tpu.concatenate %1, %3 in 1 : vector<4x256xf32>, vector<4x256xf32> -> vector<4x512xf32>
    %c17_i32 = arith.constant 17 : i32
    %5 = tpu.dynamic_rotate %4 by %c17_i32 dim 1 : vector<4x512xf32>, i32 -> vector<4x512xf32>
    %c0_4 = arith.constant 0 : index
    %c0_5 = arith.constant 0 : index
    %6 = vector.load %arg2[%c0_4, %c0_5] : memref<40x512xf32, #tpu.memory_space<vmem>>, vector<4x512xf32>
    %7 = arith.mulf %5, %6 : vector<4x512xf32>
    %c0_6 = arith.constant 0 : index
    %c0_7 = arith.constant 0 : index
    %8 = vector.load %arg4[%c0_6, %c0_7] : memref<40x512xf32, #tpu.memory_space<vmem>>, vector<4x512xf32>
    tpu.vector_store %arg4[%c0_6, %c0_7], %7 {strides = array<i32>} : memref<40x512xf32, #tpu.memory_space<vmem>>, vector<4x512xf32>,
    %c16_i32 = arith.constant 16 : i32
    %9 = tpu.dynamic_rotate %4 by %c16_i32 dim 1 : vector<4x512xf32>, i32 -> vector<4x512xf32>
    %c4 = arith.constant 4 : index
    %c0_8 = arith.constant 0 : index
    %10 = vector.load %arg2[%c4, %c0_8] : memref<40x512xf32, #tpu.memory_space<vmem>>, vector<4x512xf32>
    %11 = arith.mulf %9, %10 : vector<4x512xf32>
    %c4_9 = arith.constant 4 : index
    %c0_10 = arith.constant 0 : index
    %12 = vector.load %arg4[%c4_9, %c0_10] : memref<40x512xf32, #tpu.memory_space<vmem>>, vector<4x512xf32>
    tpu.vector_store %arg4[%c4_9, %c0_10], %11 {strides = array<i32>} : memref<40x512xf32, #tpu.memory_space<vmem>>, vector<4x512xf32>,
    %c15_i32 = arith.constant 15 : i32
    %13 = tpu.dynamic_rotate %4 by %c15_i32 dim 1 : vector<4x512xf32>, i32 -> vector<4x512xf32>
    %c8 = arith.constant 8 : index
    %c0_11 = arith.constant 0 : index
    %14 = vector.load %arg2[%c8, %c0_11] : memref<40x512xf32, #tpu.memory_space<vmem>>, vector<4x512xf32>
    %15 = arith.mulf %13, %14 : vector<4x512xf32>
    %c8_12 = arith.constant 8 : index
    %c0_13 = arith.constant 0 : index
    %16 = vector.load %arg4[%c8_12, %c0_13] : memref<40x512xf32, #tpu.memory_space<vmem>>, vector<4x512xf32>
    tpu.vector_store %arg4[%c8_12, %c0_13], %15 {strides = array<i32>} : memref<40x512xf32, #tpu.memory_space<vmem>>, vector<4x512xf32>,
    %c1_i32 = arith.constant 1 : i32
    %17 = tpu.dynamic_rotate %4 by %c1_i32 dim 1 : vector<4x512xf32>, i32 -> vector<4x512xf32>
    %c12 = arith.constant 12 : index
    %c0_14 = arith.constant 0 : index
    %18 = vector.load %arg2[%c12, %c0_14] : memref<40x512xf32, #tpu.memory_space<vmem>>, vector<4x512xf32>
    %19 = arith.mulf %17, %18 : vector<4x512xf32>
    %c12_15 = arith.constant 12 : index
    %c0_16 = arith.constant 0 : index
    %20 = vector.load %arg4[%c12_15, %c0_16] : memref<40x512xf32, #tpu.memory_space<vmem>>, vector<4x512xf32>
    tpu.vector_store %arg4[%c12_15, %c0_16], %19 {strides = array<i32>} : memref<40x512xf32, #tpu.memory_space<vmem>>, vector<4x512xf32>,
    %c16 = arith.constant 16 : index
    %c0_17 = arith.constant 0 : index
    %21 = vector.load %arg4[%c16, %c0_17] : memref<40x512xf32, #tpu.memory_space<vmem>>, vector<4x512xf32>
    tpu.vector_store %arg4[%c16, %c0_17], %4 {strides = array<i32>} : memref<40x512xf32, #tpu.memory_space<vmem>>, vector<4x512xf32>,
    %c511_i32 = arith.constant 511 : i32
    %22 = tpu.dynamic_rotate %4 by %c511_i32 dim 1 : vector<4x512xf32>, i32 -> vector<4x512xf32>
    %c20 = arith.constant 20 : index
    %c0_18 = arith.constant 0 : index
    %23 = vector.load %arg2[%c20, %c0_18] : memref<40x512xf32, #tpu.memory_space<vmem>>, vector<4x512xf32>
    %24 = arith.mulf %22, %23 : vector<4x512xf32>
    %c20_19 = arith.constant 20 : index
    %c0_20 = arith.constant 0 : index
    %25 = vector.load %arg4[%c20_19, %c0_20] : memref<40x512xf32, #tpu.memory_space<vmem>>, vector<4x512xf32>
    tpu.vector_store %arg4[%c20_19, %c0_20], %24 {strides = array<i32>} : memref<40x512xf32, #tpu.memory_space<vmem>>, vector<4x512xf32>,
    %c497_i32 = arith.constant 497 : i32
    %26 = tpu.dynamic_rotate %4 by %c497_i32 dim 1 : vector<4x512xf32>, i32 -> vector<4x512xf32>
    %c24 = arith.constant 24 : index
    %c0_21 = arith.constant 0 : index
    %27 = vector.load %arg2[%c24, %c0_21] : memref<40x512xf32, #tpu.memory_space<vmem>>, vector<4x512xf32>
    %28 = arith.mulf %26, %27 : vector<4x512xf32>
    %c24_22 = arith.constant 24 : index
    %c0_23 = arith.constant 0 : index
    %29 = vector.load %arg4[%c24_22, %c0_23] : memref<40x512xf32, #tpu.memory_space<vmem>>, vector<4x512xf32>
    tpu.vector_store %arg4[%c24_22, %c0_23], %28 {strides = array<i32>} : memref<40x512xf32, #tpu.memory_space<vmem>>, vector<4x512xf32>,
    %c496_i32 = arith.constant 496 : i32
    %30 = tpu.dynamic_rotate %4 by %c496_i32 dim 1 : vector<4x512xf32>, i32 -> vector<4x512xf32>
    %c28 = arith.constant 28 : index
    %c0_24 = arith.constant 0 : index
    %31 = vector.load %arg2[%c28, %c0_24] : memref<40x512xf32, #tpu.memory_space<vmem>>, vector<4x512xf32>
    %32 = arith.mulf %30, %31 : vector<4x512xf32>
    %c28_25 = arith.constant 28 : index
    %c0_26 = arith.constant 0 : index
    %33 = vector.load %arg4[%c28_25, %c0_26] : memref<40x512xf32, #tpu.memory_space<vmem>>, vector<4x512xf32>
    tpu.vector_store %arg4[%c28_25, %c0_26], %32 {strides = array<i32>} : memref<40x512xf32, #tpu.memory_space<vmem>>, vector<4x512xf32>,
    %c495_i32 = arith.constant 495 : i32
    %34 = tpu.dynamic_rotate %4 by %c495_i32 dim 1 : vector<4x512xf32>, i32 -> vector<4x512xf32>
    %c32 = arith.constant 32 : index
    %c0_27 = arith.constant 0 : index
    %35 = vector.load %arg2[%c32, %c0_27] : memref<40x512xf32, #tpu.memory_space<vmem>>, vector<4x512xf32>
    %36 = arith.mulf %34, %35 : vector<4x512xf32>
    %c32_28 = arith.constant 32 : index
    %c0_29 = arith.constant 0 : index
    %37 = vector.load %arg4[%c32_28, %c0_29] : memref<40x512xf32, #tpu.memory_space<vmem>>, vector<4x512xf32>
    tpu.vector_store %arg4[%c32_28, %c0_29], %36 {strides = array<i32>} : memref<40x512xf32, #tpu.memory_space<vmem>>, vector<4x512xf32>,
    %c36 = arith.constant 36 : index
    %c0_30 = arith.constant 0 : index
    %38 = vector.load %arg2[%c36, %c0_30] : memref<40x512xf32, #tpu.memory_space<vmem>>, vector<4x512xf32>
    %c36_31 = arith.constant 36 : index
    %c0_32 = arith.constant 0 : index
    %39 = vector.load %arg4[%c36_31, %c0_32] : memref<40x512xf32, #tpu.memory_space<vmem>>, vector<4x512xf32>
    tpu.vector_store %arg4[%c36_31, %c0_32], %38 {strides = array<i32>} : memref<40x512xf32, #tpu.memory_space<vmem>>, vector<4x512xf32>,
    %c0_33 = arith.constant 0 : index
    %c0_34 = arith.constant 0 : index
    %40 = vector.load %arg1[%c0_33, %c0_34] : memref<8x40xf32, #tpu.memory_space<vmem>>, vector<8x40xf32>
    %c0_35 = arith.constant 0 : index
    %c0_36 = arith.constant 0 : index
    %41 = vector.load %arg4[%c0_35, %c0_36] : memref<40x512xf32, #tpu.memory_space<vmem>>, vector<40x512xf32>
    %cst = arith.constant dense<0.000000e+00> : vector<8x512xf32>
    %42 = tpu.matmul %40, %41, %cst {dimension_numbers = #tpu.dot_dimension_numbers<[1], [0], [0], [1], [0, 0, 1, 1], [], []>} : vector<8x40xf32>, vector<40x512xf32>, vector<8x512xf32> -> vector<8x512xf32>
    %43 = vector.extract_strided_slice %42 {offsets = [0, 0], sizes = [8, 256], strides = [1, 1]} : vector<8x512xf32> to vector<8x256xf32>
    %c0_37 = arith.constant 0 : index
    %c0_38 = arith.constant 0 : index
    %c0_39 = arith.constant 0 : index
    %44 = vector.load %arg3[%c0_37, %c0_38, %c0_39] : memref<2x8x256xf32, #tpu.memory_space<vmem>>, vector<1x8x256xf32>
    %45 = vector.shape_cast %44 : vector<1x8x256xf32> to vector<8x256xf32>
    %46 = vector.shape_cast %43 : vector<8x256xf32> to vector<1x8x256xf32>
    tpu.vector_store %arg3[%c0_37, %c0_38, %c0_39], %46 {strides = array<i32>} : memref<2x8x256xf32, #tpu.memory_space<vmem>>, vector<1x8x256xf32>,
    %47 = vector.extract_strided_slice %42 {offsets = [0, 256], sizes = [8, 256], strides = [1, 1]} : vector<8x512xf32> to vector<8x256xf32>
    %c1_40 = arith.constant 1 : index
    %c0_41 = arith.constant 0 : index
    %c0_42 = arith.constant 0 : index
    %48 = vector.load %arg3[%c1_40, %c0_41, %c0_42] : memref<2x8x256xf32, #tpu.memory_space<vmem>>, vector<1x8x256xf32>
    %49 = vector.shape_cast %48 : vector<1x8x256xf32> to vector<8x256xf32>
    %50 = vector.shape_cast %47 : vector<8x256xf32> to vector<1x8x256xf32>
    tpu.vector_store %arg3[%c1_40, %c0_41, %c0_42], %50 {strides = array<i32>} : memref<2x8x256xf32, #tpu.memory_space<vmem>>, vector<1x8x256xf32>,
    return
  }
}

</mosaic_0001>

<llo_original>
// kernel: tpu_custom_call.1
$region0: #{tpu_custom_call.1}
  #allocation0 [shape = 'u32[]', space=smem, size = 0x4, offset = 0x4, fixed_abs, tag = 'smem constant byte address 0x4 - core index']
  #allocation1 [shape = 'u32[144,128]{1,0:T(1,128)}', space=vmem, size = 0x12000, scoped, tag = 'internal scratch']
  #allocation2 [shape = 'f32[40,512]{1,0:T(8,128)}', space=vmem, size = 0x14000, scoped, tag = 'scratch operand']
  %s0 = inlined_call_operand.hbm [shape: f32[2,4,256], index: 0, kind: input, shape index: {}]
  %s1 = inlined_call_operand.hbm [shape: f32[8,40], index: 1, kind: input, shape index: {}]
  %s2 = inlined_call_operand.hbm [shape: f32[40,512], index: 2, kind: input, shape index: {}]
  %s3 = inlined_call_operand.hbm [shape: f32[2,8,256], index: 3, kind: output, shape index: {}]
  %s4 = sld [smem:[#allocation0]]
  $region34: #{tpu_custom_call.1} parent=0
    _
  %s6 = ssub.s32 1, %s4
  %s7 = scalar_select 0, %s6, %s4
  $region1: #{tpu_custom_call.1} parent=0
    #allocation3 [shape = 'u8[8192]{0}', space=vmem, size = 0x2000, scoped, tag = 'input window, operand 0, single buffered']
    #allocation4 [shape = 's32[1]{0}', space=sflag, size = 0x4, scoped, tag = 'scoped memory for tpu_custom_call.1']
    #allocation5 [shape = 's32[1]{0}', space=sflag, size = 0x4, scoped, tag = 'scoped memory for tpu_custom_call.1']
    #allocation6 [shape = 'u8[4096]{0}', space=vmem, size = 0x1000, scoped, tag = 'input window, operand 1, single buffered']
    #allocation7 [shape = 's32[1]{0}', space=sflag, size = 0x4, scoped, tag = 'scoped memory for tpu_custom_call.1']
    #allocation8 [shape = 'u8[81920]{0}', space=vmem, size = 0x14000, scoped, tag = 'input window, operand 2, single buffered']
    #allocation9 [shape = 'u8[16384]{0}', space=vmem, size = 0x4000, scoped, tag = 'output window, operand 0, single buffered']
    %8 = vsyncpa [#allocation4], 0
    %9 = vsyncpa [#allocation7], 0
    %10 = vsyncpa [#allocation5], 0
    // Predicated region
    $region2: #{tpu_custom_call.1} parent=1 // pred_check
      _
    $region3: #{tpu_custom_call.1} parent=1 // pred_check_branch
      %12 = sbr.rel (0) target = $region5
    $region4: #{tpu_custom_call.1} parent=1 // pred_region
      %s14 = ssub.s32 256, 256
      %15 = vsyncadd [#allocation4], %s14
      %s16 = sshll.u32 [#allocation3], 4
      %s17 = int_to_ptr.vmem [resolvable:$true] %s16
      %22 = dma.hbm_to_vmem [thread:$0]  %s0, 256, %s17, [#allocation4], 128, 128, 8
    $region5: #{tpu_custom_call.1} parent=1 // pred_fallthru
      _
    // Predicated region
    $region6: #{tpu_custom_call.1} parent=1 // pred_check
      _
    $region7: #{tpu_custom_call.1} parent=1 // pred_check_branch
      %24 = sbr.rel (0) target = $region9
    $region8: #{tpu_custom_call.1} parent=1 // pred_region
      %s26 = ssub.s32 128, 128
      %27 = vsyncadd [#allocation7], %s26
      %s29 = sshll.u32 [#allocation6], 4
      %s30 = int_to_ptr.vmem [resolvable:$true] %s29
      %32 = dma.hbm_to_vmem [thread:$0]  %s1, 128, %s30, [#allocation7]
    $region9: #{tpu_custom_call.1} parent=1 // pred_fallthru
      _
    // Predicated region
    $region10: #{tpu_custom_call.1} parent=1 // pred_check
      _
    $region11: #{tpu_custom_call.1} parent=1 // pred_check_branch
      %34 = sbr.rel (0) target = $region13
    $region12: #{tpu_custom_call.1} parent=1 // pred_region
      %s36 = ssub.s32 2560, 2560
      %37 = vsyncadd [#allocation7], %s36
      %s38 = sshll.u32 [#allocation8], 4
      %s39 = int_to_ptr.vmem [resolvable:$true] %s38
      %44 = dma.hbm_to_vmem [thread:$0]  %s2, 2560, %s39, [#allocation7], 512, 512, 32
    $region13: #{tpu_custom_call.1} parent=1 // pred_fallthru
      _
    // Predicated region
    $region14: #{tpu_custom_call.1} parent=1 // pred_check
      _
    $region15: #{tpu_custom_call.1} parent=1 // pred_check_branch
      %46 = sbr.rel (0) target = $region17
    $region16: #{tpu_custom_call.1} parent=1 // pred_region
      %47 = dma.done [#allocation4], 256
    $region17: #{tpu_custom_call.1} parent=1 // pred_fallthru
      _
    // Predicated region
    $region18: #{tpu_custom_call.1} parent=1 // pred_check
      _
    $region19: #{tpu_custom_call.1} parent=1 // pred_check_branch
      %49 = sbr.rel (0) target = $region21
    $region20: #{tpu_custom_call.1} parent=1 // pred_region
      %50 = dma.done [#allocation7], 128
    $region21: #{tpu_custom_call.1} parent=1 // pred_fallthru
      _
    // Predicated region
    $region22: #{tpu_custom_call.1} parent=1 // pred_check
      _
    $region23: #{tpu_custom_call.1} parent=1 // pred_check_branch
      %52 = sbr.rel (0) target = $region25
    $region24: #{tpu_custom_call.1} parent=1 // pred_region
      %53 = dma.done [#allocation7], 2560
    $region25: #{tpu_custom_call.1} parent=1 // pred_fallthru
      _
    %v54 = vld [vmem:[#allocation3] sm:$0xff]
    %s55 = scalar_lea.vmem [#allocation3], 8
    %v56 = vld [vmem:[%s55] sm:$0xff]
    %v58 = vcombine.high %v54, %v54
    %v61 = vcombine.high %v56, %v56
    %63 = vrot.lane.b32.xlu0 %v54, 17
    %v64 = vpop.permute.xlu0 %63
    %65 = vrot.lane.b32.xlu0 %v58, 17
    %v66 = vpop.permute.xlu0 %65
    %67 = vrot.lane.b32.xlu0 %v56, 17
    %v68 = vpop.permute.xlu0 %67
    %69 = vrot.lane.b32.xlu0 %v61, 17
    %v70 = vpop.permute.xlu0 %69
    %v71 = vlaneseq
    %v72 = vand.u32 %v71, 127
    %vm73 = vcmp.lt.s32.totalorder %v72, 17
    %v74 = vsel %vm73, %v68, %v70
    %v75 = vsel %vm73, %v66, %v68
    %v76 = vsel %vm73, %v64, %v66
    %v77 = vsel %vm73, %v70, %v64
    %v78 = vld [vmem:[#allocation8] sm:$0xf]
    %v79 = vld [vmem:[#allocation8 + $0x8] sm:$0xf]
    %v80 = vld [vmem:[#allocation8 + $0x10] sm:$0xf]
    %v81 = vld [vmem:[#allocation8 + $0x18] sm:$0xf]
    %v82 = vmul.f32 %v77, %v78
    %v83 = vmul.f32 %v76, %v79
    %v84 = vmul.f32 %v75, %v80
    %v85 = vmul.f32 %v74, %v81
    %86 = vst [vmem:[#allocation2] sm:$0xf] %v82
    %87 = vst [vmem:[#allocation2 + $0x8] sm:$0xf] %v83
    %88 = vst [vmem:[#allocation2 + $0x10] sm:$0xf] %v84
    %89 = vst [vmem:[#allocation2 + $0x18] sm:$0xf] %v85
    %90 = vrot.lane.b32.xlu0 %v54, 16
    %v91 = vpop.permute.xlu0 %90
    %92 = vrot.lane.b32.xlu0 %v58, 16
    %v93 = vpop.permute.xlu0 %92
    %94 = vrot.lane.b32.xlu0 %v56, 16
    %v95 = vpop.permute.xlu0 %94
    %96 = vrot.lane.b32.xlu0 %v61, 16
    %v97 = vpop.permute.xlu0 %96
    %vm98 = vcmp.lt.s32.totalorder %v72, 16
    %v99 = vsel %vm98, %v95, %v97
    %v100 = vsel %vm98, %v93, %v95
    %v101 = vsel %vm98, %v91, %v93
    %v102 = vsel %vm98, %v97, %v91
    %v103 = vld [vmem:[#allocation8] sm:$0xf0]
    %v104 = vld [vmem:[#allocation8 + $0x8] sm:$0xf0]
    %v105 = vld [vmem:[#allocation8 + $0x10] sm:$0xf0]
    %v106 = vld [vmem:[#allocation8 + $0x18] sm:$0xf0]
    %v111 = vrot.slane %v103, 4
    %v112 = vrot.slane %v104, 4
    %v113 = vrot.slane %v105, 4
    %v114 = vrot.slane %v106, 4
    %v119 = vmul.f32 %v102, %v111
    %v120 = vmul.f32 %v101, %v112
    %v121 = vmul.f32 %v100, %v113
    %v122 = vmul.f32 %v99, %v114
    %v127 = vrot.slane %v119, 4
    %v128 = vrot.slane %v120, 4
    %v129 = vrot.slane %v121, 4
    %v130 = vrot.slane %v122, 4
    %135 = vst [vmem:[#allocation2] sm:$0xf0] %v127
    %136 = vst [vmem:[#allocation2 + $0x8] sm:$0xf0] %v128
    %137 = vst [vmem:[#allocation2 + $0x10] sm:$0xf0] %v129
    %138 = vst [vmem:[#allocation2 + $0x18] sm:$0xf0] %v130
    %139 = vrot.lane.b32.xlu0 %v54, 15
    %v140 = vpop.permute.xlu0 %139
    %141 = vrot.lane.b32.xlu0 %v58, 15
    %v142 = vpop.permute.xlu0 %141
    %143 = vrot.lane.b32.xlu0 %v56, 15
    %v144 = vpop.permute.xlu0 %143
    %145 = vrot.lane.b32.xlu0 %v61, 15
    %v146 = vpop.permute.xlu0 %145
    %vm147 = vcmp.lt.s32.totalorder %v72, 15
    %v148 = vsel %vm147, %v144, %v146
    %v149 = vsel %vm147, %v142, %v144
    %v150 = vsel %vm147, %v140, %v142
    %v151 = vsel %vm147, %v146, %v140
    %v152 = vld [vmem:[#allocation8 + $0x20] sm:$0xf]
    %v153 = vld [vmem:[#allocation8 + $0x28] sm:$0xf]
    %v154 = vld [vmem:[#allocation8 + $0x30] sm:$0xf]
    %v155 = vld [vmem:[#allocation8 + $0x38] sm:$0xf]
    %v156 = vmul.f32 %v151, %v152
    %v157 = vmul.f32 %v150, %v153
    %v158 = vmul.f32 %v149, %v154
    %v159 = vmul.f32 %v148, %v155
    %160 = vst [vmem:[#allocation2 + $0x20] sm:$0xf] %v156
    %161 = vst [vmem:[#allocation2 + $0x28] sm:$0xf] %v157
    %162 = vst [vmem:[#allocation2 + $0x30] sm:$0xf] %v158
    %163 = vst [vmem:[#allocation2 + $0x38] sm:$0xf] %v159
    %164 = vrot.lane.b32.xlu0 %v54, 1
    %v165 = vpop.permute.xlu0 %164
    %166 = vrot.lane.b32.xlu0 %v58, 1
    %v167 = vpop.permute.xlu0 %166
    %168 = vrot.lane.b32.xlu0 %v56, 1
    %v169 = vpop.permute.xlu0 %168
    %170 = vrot.lane.b32.xlu0 %v61, 1
    %v171 = vpop.permute.xlu0 %170
    %vm172 = vcmp.lt.s32.totalorder %v72, 1
    %v173 = vsel %vm172, %v169, %v171
    %v174 = vsel %vm172, %v167, %v169
    %v175 = vsel %vm172, %v165, %v167
    %v176 = vsel %vm172, %v171, %v165
    %v177 = vld [vmem:[#allocation8 + $0x20] sm:$0xf0]
    %v178 = vld [vmem:[#allocation8 + $0x28] sm:$0xf0]
    %v179 = vld [vmem:[#allocation8 + $0x30] sm:$0xf0]
    %v180 = vld [vmem:[#allocation8 + $0x38] sm:$0xf0]
    %v185 = vrot.slane %v177, 4
    %v186 = vrot.slane %v178, 4
    %v187 = vrot.slane %v179, 4
    %v188 = vrot.slane %v180, 4
    %v193 = vmul.f32 %v176, %v185
    %v194 = vmul.f32 %v175, %v186
    %v195 = vmul.f32 %v174, %v187
    %v196 = vmul.f32 %v173, %v188
    %v201 = vrot.slane %v193, 4
    %v202 = vrot.slane %v194, 4
    %v203 = vrot.slane %v195, 4
    %v204 = vrot.slane %v196, 4
    %209 = vst [vmem:[#allocation2 + $0x20] sm:$0xf0] %v201
    %210 = vst [vmem:[#allocation2 + $0x28] sm:$0xf0] %v202
    %211 = vst [vmem:[#allocation2 + $0x30] sm:$0xf0] %v203
    %212 = vst [vmem:[#allocation2 + $0x38] sm:$0xf0] %v204
    %213 = vst [vmem:[#allocation2 + $0x40] sm:$0xf] %v54
    %214 = vst [vmem:[#allocation2 + $0x48] sm:$0xf] %v58
    %215 = vst [vmem:[#allocation2 + $0x50] sm:$0xf] %v56
    %216 = vst [vmem:[#allocation2 + $0x58] sm:$0xf] %v61
    %217 = vrot.lane.b32.xlu0 %v54, 127
    %v218 = vpop.permute.xlu0 %217
    %219 = vrot.lane.b32.xlu0 %v58, 127
    %v220 = vpop.permute.xlu0 %219
    %221 = vrot.lane.b32.xlu0 %v56, 127
    %v222 = vpop.permute.xlu0 %221
    %223 = vrot.lane.b32.xlu0 %v61, 127
    %v224 = vpop.permute.xlu0 %223
    %vm225 = vcmp.lt.s32.totalorder %v72, 127
    %v226 = vsel %vm225, %v222, %v224
    %v227 = vsel %vm225, %v220, %v222
    %v228 = vsel %vm225, %v218, %v220
    %v229 = vsel %vm225, %v224, %v218
    %v230 = vld [vmem:[#allocation8 + $0x40] sm:$0xf0]
    %v231 = vld [vmem:[#allocation8 + $0x48] sm:$0xf0]
    %v232 = vld [vmem:[#allocation8 + $0x50] sm:$0xf0]
    %v233 = vld [vmem:[#allocation8 + $0x58] sm:$0xf0]
    %v238 = vrot.slane %v230, 4
    %v239 = vrot.slane %v231, 4
    %v240 = vrot.slane %v232, 4
    %v241 = vrot.slane %v233, 4
    %v246 = vmul.f32 %v228, %v238
    %v247 = vmul.f32 %v227, %v239
    %v248 = vmul.f32 %v226, %v240
    %v249 = vmul.f32 %v229, %v241
    %v254 = vrot.slane %v246, 4
    %v255 = vrot.slane %v247, 4
    %v256 = vrot.slane %v248, 4
    %v257 = vrot.slane %v249, 4
    %262 = vst [vmem:[#allocation2 + $0x40] sm:$0xf0] %v254
    %263 = vst [vmem:[#allocation2 + $0x48] sm:$0xf0] %v255
    %264 = vst [vmem:[#allocation2 + $0x50] sm:$0xf0] %v256
    %265 = vst [vmem:[#allocation2 + $0x58] sm:$0xf0] %v257
    %266 = vrot.lane.b32.xlu0 %v54, 113
    %v267 = vpop.permute.xlu0 %266
    %268 = vrot.lane.b32.xlu0 %v58, 113
    %v269 = vpop.permute.xlu0 %268
    %270 = vrot.lane.b32.xlu0 %v56, 113
    %v271 = vpop.permute.xlu0 %270
    %272 = vrot.lane.b32.xlu0 %v61, 113
    %v273 = vpop.permute.xlu0 %272
    %vm274 = vcmp.lt.s32.totalorder %v72, 113
    %v275 = vsel %vm274, %v271, %v273
    %v276 = vsel %vm274, %v269, %v271
    %v277 = vsel %vm274, %v267, %v269
    %v278 = vsel %vm274, %v273, %v267
    %v279 = vld [vmem:[#allocation8 + $0x60] sm:$0xf]
    %v280 = vld [vmem:[#allocation8 + $0x68] sm:$0xf]
    %v281 = vld [vmem:[#allocation8 + $0x70] sm:$0xf]
    %v282 = vld [vmem:[#allocation8 + $0x78] sm:$0xf]
    %v283 = vmul.f32 %v277, %v279
    %v284 = vmul.f32 %v276, %v280
    %v285 = vmul.f32 %v275, %v281
    %v286 = vmul.f32 %v278, %v282
    %287 = vst [vmem:[#allocation2 + $0x60] sm:$0xf] %v283
    %288 = vst [vmem:[#allocation2 + $0x68] sm:$0xf] %v284
    %289 = vst [vmem:[#allocation2 + $0x70] sm:$0xf] %v285
    %290 = vst [vmem:[#allocation2 + $0x78] sm:$0xf] %v286
    %291 = vrot.lane.b32.xlu0 %v54, 112
    %v292 = vpop.permute.xlu0 %291
    %293 = vrot.lane.b32.xlu0 %v58, 112
    %v294 = vpop.permute.xlu0 %293
    %295 = vrot.lane.b32.xlu0 %v56, 112
    %v296 = vpop.permute.xlu0 %295
    %297 = vrot.lane.b32.xlu0 %v61, 112
    %v298 = vpop.permute.xlu0 %297
    %vm299 = vcmp.lt.s32.totalorder %v72, 112
    %v300 = vsel %vm299, %v296, %v298
    %v301 = vsel %vm299, %v294, %v296
    %v302 = vsel %vm299, %v292, %v294
    %v303 = vsel %vm299, %v298, %v292
    %v304 = vld [vmem:[#allocation8 + $0x60] sm:$0xf0]
    %v305 = vld [vmem:[#allocation8 + $0x68] sm:$0xf0]
    %v306 = vld [vmem:[#allocation8 + $0x70] sm:$0xf0]
    %v307 = vld [vmem:[#allocation8 + $0x78] sm:$0xf0]
    %v312 = vrot.slane %v304, 4
    %v313 = vrot.slane %v305, 4
    %v314 = vrot.slane %v306, 4
    %v315 = vrot.slane %v307, 4
    %v320 = vmul.f32 %v302, %v312
    %v321 = vmul.f32 %v301, %v313
    %v322 = vmul.f32 %v300, %v314
    %v323 = vmul.f32 %v303, %v315
    %v328 = vrot.slane %v320, 4
    %v329 = vrot.slane %v321, 4
    %v330 = vrot.slane %v322, 4
    %v331 = vrot.slane %v323, 4
    %336 = vst [vmem:[#allocation2 + $0x60] sm:$0xf0] %v328
    %337 = vst [vmem:[#allocation2 + $0x68] sm:$0xf0] %v329
    %338 = vst [vmem:[#allocation2 + $0x70] sm:$0xf0] %v330
    %339 = vst [vmem:[#allocation2 + $0x78] sm:$0xf0] %v331
    %340 = vrot.lane.b32.xlu0 %v54, 111
    %v341 = vpop.permute.xlu0 %340
    %342 = vrot.lane.b32.xlu0 %v58, 111
    %v343 = vpop.permute.xlu0 %342
    %344 = vrot.lane.b32.xlu0 %v56, 111
    %v345 = vpop.permute.xlu0 %344
    %346 = vrot.lane.b32.xlu0 %v61, 111
    %v347 = vpop.permute.xlu0 %346
    %vm348 = vcmp.lt.s32.totalorder %v72, 111
    %v349 = vsel %vm348, %v345, %v347
    %v350 = vsel %vm348, %v343, %v345
    %v351 = vsel %vm348, %v341, %v343
    %v352 = vsel %vm348, %v347, %v341
    %v353 = vld [vmem:[#allocation8 + $0x80] sm:$0xf]
    %v354 = vld [vmem:[#allocation8 + $0x88] sm:$0xf]
    %v355 = vld [vmem:[#allocation8 + $0x90] sm:$0xf]
    %v356 = vld [vmem:[#allocation8 + $0x98] sm:$0xf]
    %v357 = vmul.f32 %v351, %v353
    %v358 = vmul.f32 %v350, %v354
    %v359 = vmul.f32 %v349, %v355
    %v360 = vmul.f32 %v352, %v356
    %361 = vst [vmem:[#allocation2 + $0x80] sm:$0xf] %v357
    %362 = vst [vmem:[#allocation2 + $0x88] sm:$0xf] %v358
    %363 = vst [vmem:[#allocation2 + $0x90] sm:$0xf] %v359
    %364 = vst [vmem:[#allocation2 + $0x98] sm:$0xf] %v360
    %v365 = vld [vmem:[#allocation8 + $0x80] sm:$0xf0]
    %v366 = vld [vmem:[#allocation8 + $0x88] sm:$0xf0]
    %v367 = vld [vmem:[#allocation8 + $0x90] sm:$0xf0]
    %v368 = vld [vmem:[#allocation8 + $0x98] sm:$0xf0]
    %369 = vst [vmem:[#allocation2 + $0x80] sm:$0xf0] %v365
    %370 = vst [vmem:[#allocation2 + $0x88] sm:$0xf0] %v366
    %371 = vst [vmem:[#allocation2 + $0x90] sm:$0xf0] %v367
    %372 = vst [vmem:[#allocation2 + $0x98] sm:$0xf0] %v368
    %v373 = vld [vmem:[#allocation6] sm:$0xff]
    %v374 = vld [vmem:[#allocation2] sm:$0xff]
    %v375 = vld [vmem:[#allocation2 + $0x8] sm:$0xff]
    %v376 = vld [vmem:[#allocation2 + $0x10] sm:$0xff]
    %v377 = vld [vmem:[#allocation2 + $0x18] sm:$0xff]
    %v378 = vld [vmem:[#allocation2 + $0x20] sm:$0xff]
    %v379 = vld [vmem:[#allocation2 + $0x28] sm:$0xff]
    %v380 = vld [vmem:[#allocation2 + $0x30] sm:$0xff]
    %v381 = vld [vmem:[#allocation2 + $0x38] sm:$0xff]
    %v382 = vld [vmem:[#allocation2 + $0x40] sm:$0xff]
    %v383 = vld [vmem:[#allocation2 + $0x48] sm:$0xff]
    %v384 = vld [vmem:[#allocation2 + $0x50] sm:$0xff]
    %v385 = vld [vmem:[#allocation2 + $0x58] sm:$0xff]
    %v386 = vld [vmem:[#allocation2 + $0x60] sm:$0xff]
    %v387 = vld [vmem:[#allocation2 + $0x68] sm:$0xff]
    %v388 = vld [vmem:[#allocation2 + $0x70] sm:$0xff]
    %v389 = vld [vmem:[#allocation2 + $0x78] sm:$0xff]
    %v390 = vld [vmem:[#allocation2 + $0x80] sm:$0xff]
    %v391 = vld [vmem:[#allocation2 + $0x88] sm:$0xff]
    %v392 = vld [vmem:[#allocation2 + $0x90] sm:$0xff]
    %v393 = vld [vmem:[#allocation2 + $0x98] sm:$0xff]
    %vm394 = vcmask 326656
    %v396 = vsel %vm394, %v373, 0
    %398 = vmatprep.subr.mxu0 0.0
    %399 = vmatpush1.msra.mxu0 0.0
    %400 = vmatprep.subr.mxu0 0.0
    %401 = vmatpush1.msra.mxu0 0.0
    %402 = vmatprep.subr.mxu0 0.0
    %403 = vmatpush1.msra.mxu0 0.0
    %404 = vmatprep.subr.mxu0 0.0
    %405 = vmatpush1.msra.mxu0 0.0
    %406 = vmatprep.subr.mxu0 0.0
    %407 = vmatpush1.msra.mxu0 0.0
    %408 = vmatprep.subr.mxu0 0.0
    %409 = vmatpush1.msra.mxu0 0.0
    %410 = vmatprep.subr.mxu0 0.0
    %411 = vmatpush1.msra.mxu0 0.0
    %412 = vmatprep.subr.mxu0 0.0
    %413 = vmatpush1.msra.mxu0 0.0
    %414 = vmatprep.subr.mxu0 0.0
    %415 = vmatpush1.msra.mxu0 0.0
    %416 = vmatprep.subr.mxu0 0.0
    %417 = vmatpush1.msra.mxu0 0.0
    %418 = vmatprep.subr.mxu0 0.0
    %419 = vmatpush1.msra.mxu0 0.0
    %420 = vmatprep.subr.mxu0 %v391
    %421 = vmatpush1.msra.mxu0 %v390
    %422 = vmatprep.subr.mxu0 %v387
    %423 = vmatpush1.msra.mxu0 %v386
    %424 = vmatprep.subr.mxu0 %v383
    %425 = vmatpush1.msra.mxu0 %v382
    %426 = vmatprep.subr.mxu0 %v379
    %427 = vmatpush1.msra.mxu0 %v378
    %428 = vmatprep.subr.mxu0 %v375
    %429 = vmatpush1.msra.mxu0 %v374
    %430 = vmatprep.subr.mxu0 0.0
    %431 = vmatpush2.msra.mxu0 0.0
    %432 = vmatprep.subr.mxu0 0.0
    %433 = vmatpush2.msra.mxu0 0.0
    %434 = vmatprep.subr.mxu0 0.0
    %435 = vmatpush2.msra.mxu0 0.0
    %436 = vmatprep.subr.mxu0 0.0
    %437 = vmatpush2.msra.mxu0 0.0
    %438 = vmatprep.subr.mxu0 0.0
    %439 = vmatpush2.msra.mxu0 0.0
    %440 = vmatprep.subr.mxu0 0.0
    %441 = vmatpush2.msra.mxu0 0.0
    %442 = vmatprep.subr.mxu0 0.0
    %443 = vmatpush2.msra.mxu0 0.0
    %444 = vmatprep.subr.mxu0 0.0
    %445 = vmatpush2.msra.mxu0 0.0
    %446 = vmatprep.subr.mxu0 0.0
    %447 = vmatpush2.msra.mxu0 0.0
    %448 = vmatprep.subr.mxu0 0.0
    %449 = vmatpush2.msra.mxu0 0.0
    %450 = vmatprep.subr.mxu0 0.0
    %451 = vmatpush2.msra.mxu0 0.0
    %452 = vmatprep.subr.mxu0 0.0
    %453 = vmatpush2.msra.mxu0 0.0
    %454 = vmatprep.subr.mxu0 0.0
    %455 = vmatpush2.msra.mxu0 0.0
    %456 = vmatprep.subr.mxu0 0.0
    %457 = vmatpush2.msra.mxu0 0.0
    %458 = vmatprep.subr.mxu0 0.0
    %459 = vmatpush2.msra.mxu0 0.0
    %460 = vmatprep.subr.mxu0 0.0
    %461 = vmatpush2.msra.mxu0 0.0
    %462 = vmatprep.mubr.f32.mxu0 0.0
    %463 = vmatmul.mubr.f32.gmra.mxu0 %v396
    %v464 = vpop.f32.mrf.mxu0
    %v465 = vadd.f32 0.0, %v464
    %v466 = vpop.f32.mrf.mxu0
    %v467 = vadd.f32 0.0, %v466
    %468 = vdwg.mxu0
    %469 = vmatprep.subr.mxu0 0.0
    %470 = vmatpush1.msra.mxu0 0.0
    %471 = vmatprep.subr.mxu0 0.0
    %472 = vmatpush1.msra.mxu0 0.0
    %473 = vmatprep.subr.mxu0 0.0
    %474 = vmatpush1.msra.mxu0 0.0
    %475 = vmatprep.subr.mxu0 0.0
    %476 = vmatpush1.msra.mxu0 0.0
    %477 = vmatprep.subr.mxu0 0.0
    %478 = vmatpush1.msra.mxu0 0.0
    %479 = vmatprep.subr.mxu0 0.0
    %480 = vmatpush1.msra.mxu0 0.0
    %481 = vmatprep.subr.mxu0 0.0
    %482 = vmatpush1.msra.mxu0 0.0
    %483 = vmatprep.subr.mxu0 0.0
    %484 = vmatpush1.msra.mxu0 0.0
    %485 = vmatprep.subr.mxu0 0.0
    %486 = vmatpush1.msra.mxu0 0.0
    %487 = vmatprep.subr.mxu0 0.0
    %488 = vmatpush1.msra.mxu0 0.0
    %489 = vmatprep.subr.mxu0 0.0
    %490 = vmatpush1.msra.mxu0 0.0
    %491 = vmatprep.subr.mxu0 %v393
    %492 = vmatpush1.msra.mxu0 %v392
    %493 = vmatprep.subr.mxu0 %v389
    %494 = vmatpush1.msra.mxu0 %v388
    %495 = vmatprep.subr.mxu0 %v385
    %496 = vmatpush1.msra.mxu0 %v384
    %497 = vmatprep.subr.mxu0 %v381
    %498 = vmatpush1.msra.mxu0 %v380
    %499 = vmatprep.subr.mxu0 %v377
    %500 = vmatpush1.msra.mxu0 %v376
    %501 = vmatprep.subr.mxu0 0.0
    %502 = vmatpush2.msra.mxu0 0.0
    %503 = vmatprep.subr.mxu0 0.0
    %504 = vmatpush2.msra.mxu0 0.0
    %505 = vmatprep.subr.mxu0 0.0
    %506 = vmatpush2.msra.mxu0 0.0
    %507 = vmatprep.subr.mxu0 0.0
    %508 = vmatpush2.msra.mxu0 0.0
    %509 = vmatprep.subr.mxu0 0.0
    %510 = vmatpush2.msra.mxu0 0.0
    %511 = vmatprep.subr.mxu0 0.0
    %512 = vmatpush2.msra.mxu0 0.0
    %513 = vmatprep.subr.mxu0 0.0
    %514 = vmatpush2.msra.mxu0 0.0
    %515 = vmatprep.subr.mxu0 0.0
    %516 = vmatpush2.msra.mxu0 0.0
    %517 = vmatprep.subr.mxu0 0.0
    %518 = vmatpush2.msra.mxu0 0.0
    %519 = vmatprep.subr.mxu0 0.0
    %520 = vmatpush2.msra.mxu0 0.0
    %521 = vmatprep.subr.mxu0 0.0
    %522 = vmatpush2.msra.mxu0 0.0
    %523 = vmatprep.subr.mxu0 0.0
    %524 = vmatpush2.msra.mxu0 0.0
    %525 = vmatprep.subr.mxu0 0.0
    %526 = vmatpush2.msra.mxu0 0.0
    %527 = vmatprep.subr.mxu0 0.0
    %528 = vmatpush2.msra.mxu0 0.0
    %529 = vmatprep.subr.mxu0 0.0
    %530 = vmatpush2.msra.mxu0 0.0
    %531 = vmatprep.subr.mxu0 0.0
    %532 = vmatpush2.msra.mxu0 0.0
    %533 = vmatprep.mubr.f32.mxu0 0.0
    %534 = vmatmul.mubr.f32.gmra.mxu0 %v396
    %v535 = vpop.f32.mrf.mxu0
    %v536 = vadd.f32 0.0, %v535
    %v537 = vpop.f32.mrf.mxu0
    %v538 = vadd.f32 0.0, %v537
    %539 = vdwg.mxu0
    %540 = vst [vmem:[#allocation9] sm:$0xff] %v465
    %541 = vst [vmem:[#allocation9 + $0x8] sm:$0xff] %v467
    %s542 = scalar_lea.vmem [#allocation9], 16
    %543 = vst [vmem:[%s542] sm:$0xff] %v536
    %544 = vst [vmem:[%s542 + $0x8] sm:$0xff] %v538
    // Predicated region
    $region26: #{tpu_custom_call.1} parent=1 // pred_check
      _
    $region27: #{tpu_custom_call.1} parent=1 // pred_check_branch
      %546 = sbr.rel (0) target = $region29
    $region28: #{tpu_custom_call.1} parent=1 // pred_region
      %s548 = ssub.s32 512, 512
      %549 = vsyncadd [#allocation5], %s548
      %s550 = sshll.u32 [#allocation9], 4
      %s551 = int_to_ptr.vmem [resolvable:$true] %s550
      %556 = dma.vmem_to_hbm [thread:$0]  %s551, 512, %s3, [#allocation5], 256, 256, 16
    $region29: #{tpu_custom_call.1} parent=1 // pred_fallthru
      _
    // Predicated region
    $region30: #{tpu_custom_call.1} parent=1 // pred_check
      _
    $region31: #{tpu_custom_call.1} parent=1 // pred_check_branch
      %558 = sbr.rel (0) target = $region33
    $region32: #{tpu_custom_call.1} parent=1 // pred_region
      %559 = dma.done [#allocation5], 512
    $region33: #{tpu_custom_call.1} parent=1 // pred_fallthru
      _
    %560 = vsyncpa [#allocation4], 1
    %561 = vsyncpa [#allocation7], 1
    %562 = vsyncpa [#allocation5], 1

</llo_original>
